<compile_context>
chip_gen: v7x
topology: tpu7x:2x2x1
jax: 0.10.0
libtpu: 0.0.40
codegen_flags: <defaults>
</compile_context>

<pallas_src>
import jax
import jax.numpy as jnp
import numpy as np
from jax.experimental import pallas as pl
from jax.experimental.pallas import tpu as pltpu


def features_embedding(x, offsets, table, *, rows_per_step=8):
    """FeaturesEmbedding forward.

    x:       (B, F) int32  per-field indices
    offsets: (F,)   int32  cumulative field offsets
    table:   (V, E) float  embedding table (V = sum(field_dims))
    returns: (B, F, E)
    """
    B, F = x.shape
    V, E = table.shape
    BF = B * F
    num_chunks = (BF + rows_per_step - 1) // rows_per_step
    padded_rows = num_chunks * rows_per_step

    flat_idx = x.reshape(BF).astype(jnp.int32)
    offsets = offsets.astype(jnp.int32)

    def kernel(idx_ref, off_ref, table_ref, o_ref, sem):
        # idx_ref: (BF,) SMEM, off_ref: (F,) SMEM, table_ref: (V, E) HBM,
        # o_ref: (rows_per_step, E) VMEM output block, sem: DMA sems (rows_per_step,)
        chunk = pl.program_id(0)
        base = chunk * rows_per_step

        # Issue all row-gather DMAs for this chunk first so they overlap.
        copies = []
        for r in range(rows_per_step):            # small, static -> unrolled
            p = jnp.minimum(base + r, BF - 1)     # clamp tail (writeback is masked)
            row = idx_ref[p] + off_ref[p % F]     # offset add on the scalar core
            cp = pltpu.make_async_copy(
                table_ref.at[pl.ds(row, 1)],      # (1, E) row in HBM
                o_ref.at[pl.ds(r, 1)],            # (1, E) row of the output tile
                sem.at[r],
            )
            cp.start()
            copies.append(cp)
        for cp in copies:
            cp.wait()

    out_flat = pl.pallas_call(
        kernel,
        out_shape=jax.ShapeDtypeStruct((padded_rows, E), table.dtype),
        grid_spec=pltpu.PrefetchScalarGridSpec(
            num_scalar_prefetch=2,                 # flat_idx, offsets -> SMEM
            grid=(num_chunks,),
            in_specs=[
                pl.BlockSpec(memory_space=pl.ANY),  # table stays in HBM
            ],
            out_specs=pl.BlockSpec(
                (rows_per_step, E), lambda i, idx, off: (i, 0)
            ),
            scratch_shapes=[pltpu.SemaphoreType.DMA((rows_per_step,))],
        ),
        compiler_params=pltpu.CompilerParams(
            dimension_semantics=("parallel",),      # shards chunks across TCs on v7x
        ),
    )(flat_idx, offsets, table)

    return out_flat[:BF].reshape(B, F, E)


def features_embedding_ref(x, offsets, table):
    idx = x + offsets[None, :]
    return jnp.take(table, idx, axis=0)


if __name__ == "__main__":
    # Small shapes consistent with the module: 4 fields, batch 8, embed_dim 128
    # (multiple of 128 -> lane-dense output tiles, per the perf feedback).
    field_dims = np.array([13, 29, 37, 21], dtype=np.int64)
    embed_dim = 128
    batch = 8

    num_embeddings = int(field_dims.sum())
    offsets_np = np.array((0, *np.cumsum(field_dims)[:-1]), dtype=np.int32)

    key = jax.random.PRNGKey(0)
    k_tbl, *k_fields = jax.random.split(key, 1 + len(field_dims))

    # Xavier-uniform init of the embedding weight (as in the PyTorch module).
    bound = float(np.sqrt(6.0 / (num_embeddings + embed_dim)))
    table = jax.random.uniform(
        k_tbl, (num_embeddings, embed_dim), dtype=jnp.float32,
        minval=-bound, maxval=bound)

    # Per-field categorical indices, each within its own field cardinality.
    cols = [jax.random.randint(k, (batch, 1), 0, int(fd), dtype=jnp.int32)
            for k, fd in zip(k_fields, field_dims)]
    x = jnp.concatenate(cols, axis=1)          # (B, F)
    offsets = jnp.asarray(offsets_np)          # (F,)

    out = features_embedding(x, offsets, table, rows_per_step=8)
    out = jax.block_until_ready(out)

    ref = features_embedding_ref(x, offsets, table)
    np.testing.assert_allclose(np.asarray(out), np.asarray(ref), rtol=0, atol=0)
    print("KERNEL_OK")
</pallas_src>

<mosaic_0001>
module attributes {stable_mosaic.version = 11 : i64} {
  func.func @kernel(%arg0: i32, %arg1: memref<32xi32, #tpu.memory_space<smem>>, %arg2: memref<4xi32, #tpu.memory_space<smem>>, %arg3: memref<100x128xf32, #tpu.memory_space<any>>, %arg4: memref<8x128xf32, #tpu.memory_space<vmem>>, %arg5: memref<8x!tpu.dma_semaphore, #tpu.memory_space<semaphore_mem>>) attributes {dimension_semantics = [#tpu.dimension_semantics<parallel>], iteration_bounds = array<i64: 4>, scalar_prefetch = 2 : i64, scratch_operands = 1 : i64, tpu.core_type = #tpu.core_type<tc>, window_params = [{}, {transform_indices = @transform_1, window_bounds = array<i64: 8, 128>}]} {
    %c8_i32 = arith.constant 8 : i32
    %0 = arith.muli %arg0, %c8_i32 : i32
    %c0_i32 = arith.constant 0 : i32
    %1 = arith.addi %0, %c0_i32 : i32
    %c31_i32 = arith.constant 31 : i32
    %2 = arith.minsi %1, %c31_i32 : i32
    %3 = arith.index_cast %2 : i32 to index
    %4 = memref.load %arg1[%3] : memref<32xi32, #tpu.memory_space<smem>>
    %c4_i32 = arith.constant 4 : i32
    %c0_i32_0 = arith.constant 0 : i32
    %5 = arith.cmpi eq, %c4_i32, %c0_i32_0 : i32
    %c1_i32 = arith.constant 1 : i32
    %6 = arith.select %5, %c1_i32, %c4_i32 : i32
    %7 = arith.remsi %2, %6 : i32
    %c0_i32_1 = arith.constant 0 : i32
    %8 = arith.cmpi ne, %7, %c0_i32_1 : i32
    %c0_i32_2 = arith.constant 0 : i32
    %9 = arith.cmpi slt, %7, %c0_i32_2 : i32
    %c0_i32_3 = arith.constant 0 : i32
    %10 = arith.cmpi slt, %6, %c0_i32_3 : i32
    %11 = arith.xori %9, %10 : i1
    %12 = arith.andi %11, %8 : i1
    %13 = arith.addi %7, %6 : i32
    %14 = arith.select %12, %13, %7 : i32
    %15 = arith.index_cast %14 : i32 to index
    %16 = memref.load %arg2[%15] : memref<4xi32, #tpu.memory_space<smem>>
    %17 = arith.addi %4, %16 : i32
    %c0_i32_4 = arith.constant 0 : i32
    %c0_i32_5 = arith.constant 0 : i32
    %18 = tpu.memref_slice %arg3[%17, %c0_i32_5] : memref<100x128xf32, #tpu.memory_space<any>> -> memref<1x128xf32, #tpu.memory_space<any>>
    %c0_i32_6 = arith.constant 0 : i32
    %c0_i32_7 = arith.constant 0 : i32
    %19 = tpu.memref_slice %arg4[%c0_i32_6, %c0_i32_7] : memref<8x128xf32, #tpu.memory_space<vmem>> -> memref<1x128xf32, #tpu.memory_space<vmem>>
    %20 = tpu.memref_slice %arg5[%c0_i32_4] : memref<8x!tpu.dma_semaphore, #tpu.memory_space<semaphore_mem>> -> memref<1x!tpu.dma_semaphore, #tpu.memory_space<semaphore_mem>>
    %21 = tpu.memref_squeeze %20 : memref<1x!tpu.dma_semaphore, #tpu.memory_space<semaphore_mem>> -> memref<!tpu.dma_semaphore, #tpu.memory_space<semaphore_mem>>
    tpu.enqueue_dma source(%18 : memref<1x128xf32, #tpu.memory_space<any>>) target(%19 : memref<1x128xf32, #tpu.memory_space<vmem>>) target_semaphore(%21 : memref<!tpu.dma_semaphore, #tpu.memory_space<semaphore_mem>>)
    %c1_i32_8 = arith.constant 1 : i32
    %22 = arith.addi %0, %c1_i32_8 : i32
    %c31_i32_9 = arith.constant 31 : i32
    %23 = arith.minsi %22, %c31_i32_9 : i32
    %24 = arith.index_cast %23 : i32 to index
    %25 = memref.load %arg1[%24] : memref<32xi32, #tpu.memory_space<smem>>
    %c4_i32_10 = arith.constant 4 : i32
    %c0_i32_11 = arith.constant 0 : i32
    %26 = arith.cmpi eq, %c4_i32_10, %c0_i32_11 : i32
    %c1_i32_12 = arith.constant 1 : i32
    %27 = arith.select %26, %c1_i32_12, %c4_i32_10 : i32
    %28 = arith.remsi %23, %27 : i32
    %c0_i32_13 = arith.constant 0 : i32
    %29 = arith.cmpi ne, %28, %c0_i32_13 : i32
    %c0_i32_14 = arith.constant 0 : i32
    %30 = arith.cmpi slt, %28, %c0_i32_14 : i32
    %c0_i32_15 = arith.constant 0 : i32
    %31 = arith.cmpi slt, %27, %c0_i32_15 : i32
    %32 = arith.xori %30, %31 : i1
    %33 = arith.andi %32, %29 : i1
    %34 = arith.addi %28, %27 : i32
    %35 = arith.select %33, %34, %28 : i32
    %36 = arith.index_cast %35 : i32 to index
    %37 = memref.load %arg2[%36] : memref<4xi32, #tpu.memory_space<smem>>
    %38 = arith.addi %25, %37 : i32
    %c1_i32_16 = arith.constant 1 : i32
    %c0_i32_17 = arith.constant 0 : i32
    %39 = tpu.memref_slice %arg3[%38, %c0_i32_17] : memref<100x128xf32, #tpu.memory_space<any>> -> memref<1x128xf32, #tpu.memory_space<any>>
    %c1_i32_18 = arith.constant 1 : i32
    %c0_i32_19 = arith.constant 0 : i32
    %40 = tpu.memref_slice %arg4[%c1_i32_18, %c0_i32_19] : memref<8x128xf32, #tpu.memory_space<vmem>> -> memref<1x128xf32, #tpu.memory_space<vmem>>
    %41 = tpu.memref_slice %arg5[%c1_i32_16] : memref<8x!tpu.dma_semaphore, #tpu.memory_space<semaphore_mem>> -> memref<1x!tpu.dma_semaphore, #tpu.memory_space<semaphore_mem>>
    %42 = tpu.memref_squeeze %41 : memref<1x!tpu.dma_semaphore, #tpu.memory_space<semaphore_mem>> -> memref<!tpu.dma_semaphore, #tpu.memory_space<semaphore_mem>>
    tpu.enqueue_dma source(%39 : memref<1x128xf32, #tpu.memory_space<any>>) target(%40 : memref<1x128xf32, #tpu.memory_space<vmem>>) target_semaphore(%42 : memref<!tpu.dma_semaphore, #tpu.memory_space<semaphore_mem>>)
    %c2_i32 = arith.constant 2 : i32
    %43 = arith.addi %0, %c2_i32 : i32
    %c31_i32_20 = arith.constant 31 : i32
    %44 = arith.minsi %43, %c31_i32_20 : i32
    %45 = arith.index_cast %44 : i32 to index
    %46 = memref.load %arg1[%45] : memref<32xi32, #tpu.memory_space<smem>>
    %c4_i32_21 = arith.constant 4 : i32
    %c0_i32_22 = arith.constant 0 : i32
    %47 = arith.cmpi eq, %c4_i32_21, %c0_i32_22 : i32
    %c1_i32_23 = arith.constant 1 : i32
    %48 = arith.select %47, %c1_i32_23, %c4_i32_21 : i32
    %49 = arith.remsi %44, %48 : i32
    %c0_i32_24 = arith.constant 0 : i32
    %50 = arith.cmpi ne, %49, %c0_i32_24 : i32
    %c0_i32_25 = arith.constant 0 : i32
    %51 = arith.cmpi slt, %49, %c0_i32_25 : i32
    %c0_i32_26 = arith.constant 0 : i32
    %52 = arith.cmpi slt, %48, %c0_i32_26 : i32
    %53 = arith.xori %51, %52 : i1
    %54 = arith.andi %53, %50 : i1
    %55 = arith.addi %49, %48 : i32
    %56 = arith.select %54, %55, %49 : i32
    %57 = arith.index_cast %56 : i32 to index
    %58 = memref.load %arg2[%57] : memref<4xi32, #tpu.memory_space<smem>>
    %59 = arith.addi %46, %58 : i32
    %c2_i32_27 = arith.constant 2 : i32
    %c0_i32_28 = arith.constant 0 : i32
    %60 = tpu.memref_slice %arg3[%59, %c0_i32_28] : memref<100x128xf32, #tpu.memory_space<any>> -> memref<1x128xf32, #tpu.memory_space<any>>
    %c2_i32_29 = arith.constant 2 : i32
    %c0_i32_30 = arith.constant 0 : i32
    %61 = tpu.memref_slice %arg4[%c2_i32_29, %c0_i32_30] : memref<8x128xf32, #tpu.memory_space<vmem>> -> memref<1x128xf32, #tpu.memory_space<vmem>>
    %62 = tpu.memref_slice %arg5[%c2_i32_27] : memref<8x!tpu.dma_semaphore, #tpu.memory_space<semaphore_mem>> -> memref<1x!tpu.dma_semaphore, #tpu.memory_space<semaphore_mem>>
    %63 = tpu.memref_squeeze %62 : memref<1x!tpu.dma_semaphore, #tpu.memory_space<semaphore_mem>> -> memref<!tpu.dma_semaphore, #tpu.memory_space<semaphore_mem>>
    tpu.enqueue_dma source(%60 : memref<1x128xf32, #tpu.memory_space<any>>) target(%61 : memref<1x128xf32, #tpu.memory_space<vmem>>) target_semaphore(%63 : memref<!tpu.dma_semaphore, #tpu.memory_space<semaphore_mem>>)
    %c3_i32 = arith.constant 3 : i32
    %64 = arith.addi %0, %c3_i32 : i32
    %c31_i32_31 = arith.constant 31 : i32
    %65 = arith.minsi %64, %c31_i32_31 : i32
    %66 = arith.index_cast %65 : i32 to index
    %67 = memref.load %arg1[%66] : memref<32xi32, #tpu.memory_space<smem>>
    %c4_i32_32 = arith.constant 4 : i32
    %c0_i32_33 = arith.constant 0 : i32
    %68 = arith.cmpi eq, %c4_i32_32, %c0_i32_33 : i32
    %c1_i32_34 = arith.constant 1 : i32
    %69 = arith.select %68, %c1_i32_34, %c4_i32_32 : i32
    %70 = arith.remsi %65, %69 : i32
    %c0_i32_35 = arith.constant 0 : i32
    %71 = arith.cmpi ne, %70, %c0_i32_35 : i32
    %c0_i32_36 = arith.constant 0 : i32
    %72 = arith.cmpi slt, %70, %c0_i32_36 : i32
    %c0_i32_37 = arith.constant 0 : i32
    %73 = arith.cmpi slt, %69, %c0_i32_37 : i32
    %74 = arith.xori %72, %73 : i1
    %75 = arith.andi %74, %71 : i1
    %76 = arith.addi %70, %69 : i32
    %77 = arith.select %75, %76, %70 : i32
    %78 = arith.index_cast %77 : i32 to index
    %79 = memref.load %arg2[%78] : memref<4xi32, #tpu.memory_space<smem>>
    %80 = arith.addi %67, %79 : i32
    %c3_i32_38 = arith.constant 3 : i32
    %c0_i32_39 = arith.constant 0 : i32
    %81 = tpu.memref_slice %arg3[%80, %c0_i32_39] : memref<100x128xf32, #tpu.memory_space<any>> -> memref<1x128xf32, #tpu.memory_space<any>>
    %c3_i32_40 = arith.constant 3 : i32
    %c0_i32_41 = arith.constant 0 : i32
    %82 = tpu.memref_slice %arg4[%c3_i32_40, %c0_i32_41] : memref<8x128xf32, #tpu.memory_space<vmem>> -> memref<1x128xf32, #tpu.memory_space<vmem>>
    %83 = tpu.memref_slice %arg5[%c3_i32_38] : memref<8x!tpu.dma_semaphore, #tpu.memory_space<semaphore_mem>> -> memref<1x!tpu.dma_semaphore, #tpu.memory_space<semaphore_mem>>
    %84 = tpu.memref_squeeze %83 : memref<1x!tpu.dma_semaphore, #tpu.memory_space<semaphore_mem>> -> memref<!tpu.dma_semaphore, #tpu.memory_space<semaphore_mem>>
    tpu.enqueue_dma source(%81 : memref<1x128xf32, #tpu.memory_space<any>>) target(%82 : memref<1x128xf32, #tpu.memory_space<vmem>>) target_semaphore(%84 : memref<!tpu.dma_semaphore, #tpu.memory_space<semaphore_mem>>)
    %c4_i32_42 = arith.constant 4 : i32
    %85 = arith.addi %0, %c4_i32_42 : i32
    %c31_i32_43 = arith.constant 31 : i32
    %86 = arith.minsi %85, %c31_i32_43 : i32
    %87 = arith.index_cast %86 : i32 to index
    %88 = memref.load %arg1[%87] : memref<32xi32, #tpu.memory_space<smem>>
    %c4_i32_44 = arith.constant 4 : i32
    %c0_i32_45 = arith.constant 0 : i32
    %89 = arith.cmpi eq, %c4_i32_44, %c0_i32_45 : i32
    %c1_i32_46 = arith.constant 1 : i32
    %90 = arith.select %89, %c1_i32_46, %c4_i32_44 : i32
    %91 = arith.remsi %86, %90 : i32
    %c0_i32_47 = arith.constant 0 : i32
    %92 = arith.cmpi ne, %91, %c0_i32_47 : i32
    %c0_i32_48 = arith.constant 0 : i32
    %93 = arith.cmpi slt, %91, %c0_i32_48 : i32
    %c0_i32_49 = arith.constant 0 : i32
    %94 = arith.cmpi slt, %90, %c0_i32_49 : i32
    %95 = arith.xori %93, %94 : i1
    %96 = arith.andi %95, %92 : i1
    %97 = arith.addi %91, %90 : i32
    %98 = arith.select %96, %97, %91 : i32
    %99 = arith.index_cast %98 : i32 to index
    %100 = memref.load %arg2[%99] : memref<4xi32, #tpu.memory_space<smem>>
    %101 = arith.addi %88, %100 : i32
    %c4_i32_50 = arith.constant 4 : i32
    %c0_i32_51 = arith.constant 0 : i32
    %102 = tpu.memref_slice %arg3[%101, %c0_i32_51] : memref<100x128xf32, #tpu.memory_space<any>> -> memref<1x128xf32, #tpu.memory_space<any>>
    %c4_i32_52 = arith.constant 4 : i32
    %c0_i32_53 = arith.constant 0 : i32
    %103 = tpu.memref_slice %arg4[%c4_i32_52, %c0_i32_53] : memref<8x128xf32, #tpu.memory_space<vmem>> -> memref<1x128xf32, #tpu.memory_space<vmem>>
    %104 = tpu.memref_slice %arg5[%c4_i32_50] : memref<8x!tpu.dma_semaphore, #tpu.memory_space<semaphore_mem>> -> memref<1x!tpu.dma_semaphore, #tpu.memory_space<semaphore_mem>>
    %105 = tpu.memref_squeeze %104 : memref<1x!tpu.dma_semaphore, #tpu.memory_space<semaphore_mem>> -> memref<!tpu.dma_semaphore, #tpu.memory_space<semaphore_mem>>
    tpu.enqueue_dma source(%102 : memref<1x128xf32, #tpu.memory_space<any>>) target(%103 : memref<1x128xf32, #tpu.memory_space<vmem>>) target_semaphore(%105 : memref<!tpu.dma_semaphore, #tpu.memory_space<semaphore_mem>>)
    %c5_i32 = arith.constant 5 : i32
    %106 = arith.addi %0, %c5_i32 : i32
    %c31_i32_54 = arith.constant 31 : i32
    %107 = arith.minsi %106, %c31_i32_54 : i32
    %108 = arith.index_cast %107 : i32 to index
    %109 = memref.load %arg1[%108] : memref<32xi32, #tpu.memory_space<smem>>
    %c4_i32_55 = arith.constant 4 : i32
    %c0_i32_56 = arith.constant 0 : i32
    %110 = arith.cmpi eq, %c4_i32_55, %c0_i32_56 : i32
    %c1_i32_57 = arith.constant 1 : i32
    %111 = arith.select %110, %c1_i32_57, %c4_i32_55 : i32
    %112 = arith.remsi %107, %111 : i32
    %c0_i32_58 = arith.constant 0 : i32
    %113 = arith.cmpi ne, %112, %c0_i32_58 : i32
    %c0_i32_59 = arith.constant 0 : i32
    %114 = arith.cmpi slt, %112, %c0_i32_59 : i32
    %c0_i32_60 = arith.constant 0 : i32
    %115 = arith.cmpi slt, %111, %c0_i32_60 : i32
    %116 = arith.xori %114, %115 : i1
    %117 = arith.andi %116, %113 : i1
    %118 = arith.addi %112, %111 : i32
    %119 = arith.select %117, %118, %112 : i32
    %120 = arith.index_cast %119 : i32 to index
    %121 = memref.load %arg2[%120] : memref<4xi32, #tpu.memory_space<smem>>
    %122 = arith.addi %109, %121 : i32
    %c5_i32_61 = arith.constant 5 : i32
    %c0_i32_62 = arith.constant 0 : i32
    %123 = tpu.memref_slice %arg3[%122, %c0_i32_62] : memref<100x128xf32, #tpu.memory_space<any>> -> memref<1x128xf32, #tpu.memory_space<any>>
    %c5_i32_63 = arith.constant 5 : i32
    %c0_i32_64 = arith.constant 0 : i32
    %124 = tpu.memref_slice %arg4[%c5_i32_63, %c0_i32_64] : memref<8x128xf32, #tpu.memory_space<vmem>> -> memref<1x128xf32, #tpu.memory_space<vmem>>
    %125 = tpu.memref_slice %arg5[%c5_i32_61] : memref<8x!tpu.dma_semaphore, #tpu.memory_space<semaphore_mem>> -> memref<1x!tpu.dma_semaphore, #tpu.memory_space<semaphore_mem>>
    %126 = tpu.memref_squeeze %125 : memref<1x!tpu.dma_semaphore, #tpu.memory_space<semaphore_mem>> -> memref<!tpu.dma_semaphore, #tpu.memory_space<semaphore_mem>>
    tpu.enqueue_dma source(%123 : memref<1x128xf32, #tpu.memory_space<any>>) target(%124 : memref<1x128xf32, #tpu.memory_space<vmem>>) target_semaphore(%126 : memref<!tpu.dma_semaphore, #tpu.memory_space<semaphore_mem>>)
    %c6_i32 = arith.constant 6 : i32
    %127 = arith.addi %0, %c6_i32 : i32
    %c31_i32_65 = arith.constant 31 : i32
    %128 = arith.minsi %127, %c31_i32_65 : i32
    %129 = arith.index_cast %128 : i32 to index
    %130 = memref.load %arg1[%129] : memref<32xi32, #tpu.memory_space<smem>>
    %c4_i32_66 = arith.constant 4 : i32
    %c0_i32_67 = arith.constant 0 : i32
    %131 = arith.cmpi eq, %c4_i32_66, %c0_i32_67 : i32
    %c1_i32_68 = arith.constant 1 : i32
    %132 = arith.select %131, %c1_i32_68, %c4_i32_66 : i32
    %133 = arith.remsi %128, %132 : i32
    %c0_i32_69 = arith.constant 0 : i32
    %134 = arith.cmpi ne, %133, %c0_i32_69 : i32
    %c0_i32_70 = arith.constant 0 : i32
    %135 = arith.cmpi slt, %133, %c0_i32_70 : i32
    %c0_i32_71 = arith.constant 0 : i32
    %136 = arith.cmpi slt, %132, %c0_i32_71 : i32
    %137 = arith.xori %135, %136 : i1
    %138 = arith.andi %137, %134 : i1
    %139 = arith.addi %133, %132 : i32
    %140 = arith.select %138, %139, %133 : i32
    %141 = arith.index_cast %140 : i32 to index
    %142 = memref.load %arg2[%141] : memref<4xi32, #tpu.memory_space<smem>>
    %143 = arith.addi %130, %142 : i32
    %c6_i32_72 = arith.constant 6 : i32
    %c0_i32_73 = arith.constant 0 : i32
    %144 = tpu.memref_slice %arg3[%143, %c0_i32_73] : memref<100x128xf32, #tpu.memory_space<any>> -> memref<1x128xf32, #tpu.memory_space<any>>
    %c6_i32_74 = arith.constant 6 : i32
    %c0_i32_75 = arith.constant 0 : i32
    %145 = tpu.memref_slice %arg4[%c6_i32_74, %c0_i32_75] : memref<8x128xf32, #tpu.memory_space<vmem>> -> memref<1x128xf32, #tpu.memory_space<vmem>>
    %146 = tpu.memref_slice %arg5[%c6_i32_72] : memref<8x!tpu.dma_semaphore, #tpu.memory_space<semaphore_mem>> -> memref<1x!tpu.dma_semaphore, #tpu.memory_space<semaphore_mem>>
    %147 = tpu.memref_squeeze %146 : memref<1x!tpu.dma_semaphore, #tpu.memory_space<semaphore_mem>> -> memref<!tpu.dma_semaphore, #tpu.memory_space<semaphore_mem>>
    tpu.enqueue_dma source(%144 : memref<1x128xf32, #tpu.memory_space<any>>) target(%145 : memref<1x128xf32, #tpu.memory_space<vmem>>) target_semaphore(%147 : memref<!tpu.dma_semaphore, #tpu.memory_space<semaphore_mem>>)
    %c7_i32 = arith.constant 7 : i32
    %148 = arith.addi %0, %c7_i32 : i32
    %c31_i32_76 = arith.constant 31 : i32
    %149 = arith.minsi %148, %c31_i32_76 : i32
    %150 = arith.index_cast %149 : i32 to index
    %151 = memref.load %arg1[%150] : memref<32xi32, #tpu.memory_space<smem>>
    %c4_i32_77 = arith.constant 4 : i32
    %c0_i32_78 = arith.constant 0 : i32
    %152 = arith.cmpi eq, %c4_i32_77, %c0_i32_78 : i32
    %c1_i32_79 = arith.constant 1 : i32
    %153 = arith.select %152, %c1_i32_79, %c4_i32_77 : i32
    %154 = arith.remsi %149, %153 : i32
    %c0_i32_80 = arith.constant 0 : i32
    %155 = arith.cmpi ne, %154, %c0_i32_80 : i32
    %c0_i32_81 = arith.constant 0 : i32
    %156 = arith.cmpi slt, %154, %c0_i32_81 : i32
    %c0_i32_82 = arith.constant 0 : i32
    %157 = arith.cmpi slt, %153, %c0_i32_82 : i32
    %158 = arith.xori %156, %157 : i1
    %159 = arith.andi %158, %155 : i1
    %160 = arith.addi %154, %153 : i32
    %161 = arith.select %159, %160, %154 : i32
    %162 = arith.index_cast %161 : i32 to index
    %163 = memref.load %arg2[%162] : memref<4xi32, #tpu.memory_space<smem>>
    %164 = arith.addi %151, %163 : i32
    %c7_i32_83 = arith.constant 7 : i32
    %c0_i32_84 = arith.constant 0 : i32
    %165 = tpu.memref_slice %arg3[%164, %c0_i32_84] : memref<100x128xf32, #tpu.memory_space<any>> -> memref<1x128xf32, #tpu.memory_space<any>>
    %c7_i32_85 = arith.constant 7 : i32
    %c0_i32_86 = arith.constant 0 : i32
    %166 = tpu.memref_slice %arg4[%c7_i32_85, %c0_i32_86] : memref<8x128xf32, #tpu.memory_space<vmem>> -> memref<1x128xf32, #tpu.memory_space<vmem>>
    %167 = tpu.memref_slice %arg5[%c7_i32_83] : memref<8x!tpu.dma_semaphore, #tpu.memory_space<semaphore_mem>> -> memref<1x!tpu.dma_semaphore, #tpu.memory_space<semaphore_mem>>
    %168 = tpu.memref_squeeze %167 : memref<1x!tpu.dma_semaphore, #tpu.memory_space<semaphore_mem>> -> memref<!tpu.dma_semaphore, #tpu.memory_space<semaphore_mem>>
    tpu.enqueue_dma source(%165 : memref<1x128xf32, #tpu.memory_space<any>>) target(%166 : memref<1x128xf32, #tpu.memory_space<vmem>>) target_semaphore(%168 : memref<!tpu.dma_semaphore, #tpu.memory_space<semaphore_mem>>)
    %c0_i32_87 = arith.constant 0 : i32
    %c0_i32_88 = arith.constant 0 : i32
    %169 = tpu.memref_slice %arg3[%17, %c0_i32_88] : memref<100x128xf32, #tpu.memory_space<any>> -> memref<1x128xf32, #tpu.memory_space<any>>
    %c0_i32_89 = arith.constant 0 : i32
    %c0_i32_90 = arith.constant 0 : i32
    %170 = tpu.memref_slice %arg4[%c0_i32_89, %c0_i32_90] : memref<8x128xf32, #tpu.memory_space<vmem>> -> memref<1x128xf32, #tpu.memory_space<vmem>>
    %171 = tpu.memref_slice %arg5[%c0_i32_87] : memref<8x!tpu.dma_semaphore, #tpu.memory_space<semaphore_mem>> -> memref<1x!tpu.dma_semaphore, #tpu.memory_space<semaphore_mem>>
    %172 = tpu.memref_squeeze %171 : memref<1x!tpu.dma_semaphore, #tpu.memory_space<semaphore_mem>> -> memref<!tpu.dma_semaphore, #tpu.memory_space<semaphore_mem>>
    tpu.wait_dma2 semaphore(%172 : memref<!tpu.dma_semaphore, #tpu.memory_space<semaphore_mem>>) src(%169 : memref<1x128xf32, #tpu.memory_space<any>>) dst(%170 : memref<1x128xf32, #tpu.memory_space<vmem>>)
    %c1_i32_91 = arith.constant 1 : i32
    %c0_i32_92 = arith.constant 0 : i32
    %173 = tpu.memref_slice %arg3[%38, %c0_i32_92] : memref<100x128xf32, #tpu.memory_space<any>> -> memref<1x128xf32, #tpu.memory_space<any>>
    %c1_i32_93 = arith.constant 1 : i32
    %c0_i32_94 = arith.constant 0 : i32
    %174 = tpu.memref_slice %arg4[%c1_i32_93, %c0_i32_94] : memref<8x128xf32, #tpu.memory_space<vmem>> -> memref<1x128xf32, #tpu.memory_space<vmem>>
    %175 = tpu.memref_slice %arg5[%c1_i32_91] : memref<8x!tpu.dma_semaphore, #tpu.memory_space<semaphore_mem>> -> memref<1x!tpu.dma_semaphore, #tpu.memory_space<semaphore_mem>>
    %176 = tpu.memref_squeeze %175 : memref<1x!tpu.dma_semaphore, #tpu.memory_space<semaphore_mem>> -> memref<!tpu.dma_semaphore, #tpu.memory_space<semaphore_mem>>
    tpu.wait_dma2 semaphore(%176 : memref<!tpu.dma_semaphore, #tpu.memory_space<semaphore_mem>>) src(%173 : memref<1x128xf32, #tpu.memory_space<any>>) dst(%174 : memref<1x128xf32, #tpu.memory_space<vmem>>)
    %c2_i32_95 = arith.constant 2 : i32
    %c0_i32_96 = arith.constant 0 : i32
    %177 = tpu.memref_slice %arg3[%59, %c0_i32_96] : memref<100x128xf32, #tpu.memory_space<any>> -> memref<1x128xf32, #tpu.memory_space<any>>
    %c2_i32_97 = arith.constant 2 : i32
    %c0_i32_98 = arith.constant 0 : i32
    %178 = tpu.memref_slice %arg4[%c2_i32_97, %c0_i32_98] : memref<8x128xf32, #tpu.memory_space<vmem>> -> memref<1x128xf32, #tpu.memory_space<vmem>>
    %179 = tpu.memref_slice %arg5[%c2_i32_95] : memref<8x!tpu.dma_semaphore, #tpu.memory_space<semaphore_mem>> -> memref<1x!tpu.dma_semaphore, #tpu.memory_space<semaphore_mem>>
    %180 = tpu.memref_squeeze %179 : memref<1x!tpu.dma_semaphore, #tpu.memory_space<semaphore_mem>> -> memref<!tpu.dma_semaphore, #tpu.memory_space<semaphore_mem>>
    tpu.wait_dma2 semaphore(%180 : memref<!tpu.dma_semaphore, #tpu.memory_space<semaphore_mem>>) src(%177 : memref<1x128xf32, #tpu.memory_space<any>>) dst(%178 : memref<1x128xf32, #tpu.memory_space<vmem>>)
    %c3_i32_99 = arith.constant 3 : i32
    %c0_i32_100 = arith.constant 0 : i32
    %181 = tpu.memref_slice %arg3[%80, %c0_i32_100] : memref<100x128xf32, #tpu.memory_space<any>> -> memref<1x128xf32, #tpu.memory_space<any>>
    %c3_i32_101 = arith.constant 3 : i32
    %c0_i32_102 = arith.constant 0 : i32
    %182 = tpu.memref_slice %arg4[%c3_i32_101, %c0_i32_102] : memref<8x128xf32, #tpu.memory_space<vmem>> -> memref<1x128xf32, #tpu.memory_space<vmem>>
    %183 = tpu.memref_slice %arg5[%c3_i32_99] : memref<8x!tpu.dma_semaphore, #tpu.memory_space<semaphore_mem>> -> memref<1x!tpu.dma_semaphore, #tpu.memory_space<semaphore_mem>>
    %184 = tpu.memref_squeeze %183 : memref<1x!tpu.dma_semaphore, #tpu.memory_space<semaphore_mem>> -> memref<!tpu.dma_semaphore, #tpu.memory_space<semaphore_mem>>
    tpu.wait_dma2 semaphore(%184 : memref<!tpu.dma_semaphore, #tpu.memory_space<semaphore_mem>>) src(%181 : memref<1x128xf32, #tpu.memory_space<any>>) dst(%182 : memref<1x128xf32, #tpu.memory_space<vmem>>)
    %c4_i32_103 = arith.constant 4 : i32
    %c0_i32_104 = arith.constant 0 : i32
    %185 = tpu.memref_slice %arg3[%101, %c0_i32_104] : memref<100x128xf32, #tpu.memory_space<any>> -> memref<1x128xf32, #tpu.memory_space<any>>
    %c4_i32_105 = arith.constant 4 : i32
    %c0_i32_106 = arith.constant 0 : i32
    %186 = tpu.memref_slice %arg4[%c4_i32_105, %c0_i32_106] : memref<8x128xf32, #tpu.memory_space<vmem>> -> memref<1x128xf32, #tpu.memory_space<vmem>>
    %187 = tpu.memref_slice %arg5[%c4_i32_103] : memref<8x!tpu.dma_semaphore, #tpu.memory_space<semaphore_mem>> -> memref<1x!tpu.dma_semaphore, #tpu.memory_space<semaphore_mem>>
    %188 = tpu.memref_squeeze %187 : memref<1x!tpu.dma_semaphore, #tpu.memory_space<semaphore_mem>> -> memref<!tpu.dma_semaphore, #tpu.memory_space<semaphore_mem>>
    tpu.wait_dma2 semaphore(%188 : memref<!tpu.dma_semaphore, #tpu.memory_space<semaphore_mem>>) src(%185 : memref<1x128xf32, #tpu.memory_space<any>>) dst(%186 : memref<1x128xf32, #tpu.memory_space<vmem>>)
    %c5_i32_107 = arith.constant 5 : i32
    %c0_i32_108 = arith.constant 0 : i32
    %189 = tpu.memref_slice %arg3[%122, %c0_i32_108] : memref<100x128xf32, #tpu.memory_space<any>> -> memref<1x128xf32, #tpu.memory_space<any>>
    %c5_i32_109 = arith.constant 5 : i32
    %c0_i32_110 = arith.constant 0 : i32
    %190 = tpu.memref_slice %arg4[%c5_i32_109, %c0_i32_110] : memref<8x128xf32, #tpu.memory_space<vmem>> -> memref<1x128xf32, #tpu.memory_space<vmem>>
    %191 = tpu.memref_slice %arg5[%c5_i32_107] : memref<8x!tpu.dma_semaphore, #tpu.memory_space<semaphore_mem>> -> memref<1x!tpu.dma_semaphore, #tpu.memory_space<semaphore_mem>>
    %192 = tpu.memref_squeeze %191 : memref<1x!tpu.dma_semaphore, #tpu.memory_space<semaphore_mem>> -> memref<!tpu.dma_semaphore, #tpu.memory_space<semaphore_mem>>
    tpu.wait_dma2 semaphore(%192 : memref<!tpu.dma_semaphore, #tpu.memory_space<semaphore_mem>>) src(%189 : memref<1x128xf32, #tpu.memory_space<any>>) dst(%190 : memref<1x128xf32, #tpu.memory_space<vmem>>)
    %c6_i32_111 = arith.constant 6 : i32
    %c0_i32_112 = arith.constant 0 : i32
    %193 = tpu.memref_slice %arg3[%143, %c0_i32_112] : memref<100x128xf32, #tpu.memory_space<any>> -> memref<1x128xf32, #tpu.memory_space<any>>
    %c6_i32_113 = arith.constant 6 : i32
    %c0_i32_114 = arith.constant 0 : i32
    %194 = tpu.memref_slice %arg4[%c6_i32_113, %c0_i32_114] : memref<8x128xf32, #tpu.memory_space<vmem>> -> memref<1x128xf32, #tpu.memory_space<vmem>>
    %195 = tpu.memref_slice %arg5[%c6_i32_111] : memref<8x!tpu.dma_semaphore, #tpu.memory_space<semaphore_mem>> -> memref<1x!tpu.dma_semaphore, #tpu.memory_space<semaphore_mem>>
    %196 = tpu.memref_squeeze %195 : memref<1x!tpu.dma_semaphore, #tpu.memory_space<semaphore_mem>> -> memref<!tpu.dma_semaphore, #tpu.memory_space<semaphore_mem>>
    tpu.wait_dma2 semaphore(%196 : memref<!tpu.dma_semaphore, #tpu.memory_space<semaphore_mem>>) src(%193 : memref<1x128xf32, #tpu.memory_space<any>>) dst(%194 : memref<1x128xf32, #tpu.memory_space<vmem>>)
    %c7_i32_115 = arith.constant 7 : i32
    %c0_i32_116 = arith.constant 0 : i32
    %197 = tpu.memref_slice %arg3[%164, %c0_i32_116] : memref<100x128xf32, #tpu.memory_space<any>> -> memref<1x128xf32, #tpu.memory_space<any>>
    %c7_i32_117 = arith.constant 7 : i32
    %c0_i32_118 = arith.constant 0 : i32
    %198 = tpu.memref_slice %arg4[%c7_i32_117, %c0_i32_118] : memref<8x128xf32, #tpu.memory_space<vmem>> -> memref<1x128xf32, #tpu.memory_space<vmem>>
    %199 = tpu.memref_slice %arg5[%c7_i32_115] : memref<8x!tpu.dma_semaphore, #tpu.memory_space<semaphore_mem>> -> memref<1x!tpu.dma_semaphore, #tpu.memory_space<semaphore_mem>>
    %200 = tpu.memref_squeeze %199 : memref<1x!tpu.dma_semaphore, #tpu.memory_space<semaphore_mem>> -> memref<!tpu.dma_semaphore, #tpu.memory_space<semaphore_mem>>
    tpu.wait_dma2 semaphore(%200 : memref<!tpu.dma_semaphore, #tpu.memory_space<semaphore_mem>>) src(%197 : memref<1x128xf32, #tpu.memory_space<any>>) dst(%198 : memref<1x128xf32, #tpu.memory_space<vmem>>)
    return
  }
  func.func @transform_1(%arg0: i32, %arg1: memref<32xi32, #tpu.memory_space<smem>>, %arg2: memref<4xi32, #tpu.memory_space<smem>>) -> (i32, i32) {
    %c0_i32 = arith.constant 0 : i32
    %c0_i32_0 = arith.constant 0 : i32
    return %arg0, %c0_i32 : i32, i32
  }
}

</mosaic_0001>

<llo_original>
// kernel: tpu_custom_call.1
$region0: #{tpu_custom_call.1}
  #allocation0 [shape = 'u32[]', space=smem, size = 0x4, offset = 0x4, fixed_abs, tag = 'smem constant byte address 0x4 - core index']
  #allocation1 [shape = 'u32[144,128]{1,0:T(1,128)}', space=vmem, size = 0x12000, scoped, tag = 'internal scratch']
  #allocation2 [shape = 's32[8]{0}', space=sflag, size = 0x20, scoped, tag = 'scratch operand']
  #allocation3 [shape = 's32[1]{0}', space=sflag, size = 0x4, scoped, tag = 'scoped memory for tpu_custom_call.1']
  #allocation4 [shape = 'u8[512]{0}', space=smem, size = 0x200, scoped, tag = 'prefetched SMEM operand 0']
  #allocation5 [shape = 'u8[512]{0}', space=smem, size = 0x200, scoped, tag = 'prefetched SMEM operand 1']
  #allocation8 [shape = 's32[]', space=sflag, size = 0x4, offset = 0, fixed_abs, tag = 'sflag constant byte address 0x0 - dummy sync flag']
  #allocation9 [shape = 's32[]', space=sflag, size = 0x4, offset = 0, fixed_abs, tag = 'sflag constant byte address 0x0 - dummy sync flag']
  #allocation10 [shape = 'u32[]', space=smem, size = 0x4, offset = 0x44, fixed_abs, tag = 'smem constant byte address 0x44 - assertion arg 0']
  #allocation11 [shape = 'u32[]', space=smem, size = 0x4, offset = 0x48, fixed_abs, tag = 'smem constant byte address 0x48 - assertion arg 1']
  #allocation12 [shape = 's32[]', space=sflag, size = 0x4, offset = 0, fixed_abs, tag = 'sflag constant byte address 0x0 - dummy sync flag']
  #allocation13 [shape = 's32[]', space=sflag, size = 0x4, offset = 0, fixed_abs, tag = 'sflag constant byte address 0x0 - dummy sync flag']
  #allocation14 [shape = 's32[]', space=sflag, size = 0x4, offset = 0, fixed_abs, tag = 'sflag constant byte address 0x0 - dummy sync flag']
  #allocation15 [shape = 's32[]', space=sflag, size = 0x4, offset = 0, fixed_abs, tag = 'sflag constant byte address 0x0 - dummy sync flag']
  #allocation16 [shape = 's32[]', space=sflag, size = 0x4, offset = 0, fixed_abs, tag = 'sflag constant byte address 0x0 - dummy sync flag']
  #allocation17 [shape = 's32[]', space=sflag, size = 0x4, offset = 0, fixed_abs, tag = 'sflag constant byte address 0x0 - dummy sync flag']
  #allocation18 [shape = 's32[]', space=sflag, size = 0x4, offset = 0, fixed_abs, tag = 'sflag constant byte address 0x0 - dummy sync flag']
  #allocation19 [shape = 's32[]', space=sflag, size = 0x4, offset = 0, fixed_abs, tag = 'sflag constant byte address 0x0 - dummy sync flag']
  #allocation20 [shape = 's32[]', space=sflag, size = 0x4, offset = 0, fixed_abs, tag = 'sflag constant byte address 0x0 - dummy sync flag']
  #allocation21 [shape = 's32[]', space=sflag, size = 0x4, offset = 0, fixed_abs, tag = 'sflag constant byte address 0x0 - dummy sync flag']
  #allocation22 [shape = 's32[]', space=sflag, size = 0x4, offset = 0, fixed_abs, tag = 'sflag constant byte address 0x0 - dummy sync flag']
  #allocation23 [shape = 's32[]', space=sflag, size = 0x4, offset = 0, fixed_abs, tag = 'sflag constant byte address 0x0 - dummy sync flag']
  #allocation24 [shape = 's32[]', space=sflag, size = 0x4, offset = 0, fixed_abs, tag = 'sflag constant byte address 0x0 - dummy sync flag']
  #allocation25 [shape = 's32[]', space=sflag, size = 0x4, offset = 0, fixed_abs, tag = 'sflag constant byte address 0x0 - dummy sync flag']
  %s0 = inlined_call_operand.hbm [shape: s32[32], index: 0, kind: input, shape index: {}]
  %s1 = inlined_call_operand.vmem [shape: s32[4], index: 1, kind: input, shape index: {}]
  %s2 = inlined_call_operand.hbm [shape: f32[100,128], index: 2, kind: input, shape index: {}]
  %s3 = inlined_call_operand.hbm [shape: f32[32,128], index: 3, kind: output, shape index: {}]
  %s4 = sld [smem:[#allocation0]]
  $region57: #{tpu_custom_call.1} parent=0
    _
  %s6 = ssub.s32 1, %s4
  %s7 = scalar_select 0, %s6, %s4
  %9 = dma.hbm_to_smem %s0, 16, [#allocation4], [#allocation3]
  %s10 = sshll.u32 %s1, 4
  %s11 = int_to_ptr.vmem [resolvable:$true] %s10
  %13 = dma.vmem_to_smem %s11, 16, [#allocation5], [#allocation3]
  %14 = dma.done [#allocation3], 32
  %15 = sfence
  $region1: #{tpu_custom_call.1} parent=0
    #allocation6 [shape = 'u8[8192]{0}', space=vmem, size = 0x2000, scoped, tag = 'output window, operand 0']
    #allocation7 [shape = 's32[2]{0}', space=sflag, size = 0x8, scoped, tag = 'scoped memory for tpu_custom_call.1']
    %16 = vsyncpa [#allocation7], 0
    %s17 = scalar_lea.sflag [#allocation7], 1
    %18 = vsyncpa %s17, 0
    loop: start=0, step=1, limit=5
    $region2: #{tpu_custom_call.1} parent=1 // loop_pre_header
      _
    $region3: #{tpu_custom_call.1} parent=1 // loop_header
      %s20 = sphi 0, %s24
      %p21 = scmp.ge.s32.totalorder %s20, 5
      %s29 = sphi 0, %s31
      %s32 = sphi 0, %s29
      %s42 = sphi 0, %s32
    $region4: #{tpu_custom_call.1} parent=1 // loop_header_branch
      %23 = sbr.rel (%p21) target = $region8
    $region5: #{tpu_custom_call.1} parent=1 // loop_body
      %s25 = ssub.s32 %s20, 1
      %s26 = sadd.s32 %s20, 1
      %s27 = ssub.s32 %s20, %s26
      %p28 = scmp.eq.s32.totalorder %s27, 0
      %s30 = sadd.s32 %s29, 1
      %s31 = scalar_select %p28, %s29, %s30
      %p33 = pneg %p28
      %p34 = scmp.eq.s32.totalorder %s20, 3
      %p35 = por %p33, %p34
      %p36 = scmp.ne.s32.totalorder %s29, %s32
      %p37 = scmp.eq.s32.totalorder %s20, 0
      %p38 = por %p36, %p37
      %p39 = scmp.ne.s32.totalorder %s29, %s32
      %p40 = scmp.eq.s32.totalorder %s25, 3
      %p41 = por %p39, %p40
      %p43 = scmp.ne.s32.totalorder %s32, %s42
      %p44 = scmp.eq.s32.totalorder %s25, 0
      %p45 = por %p43, %p44
      %p46 = scmp.lt.s32.totalorder %s20, 4
      // Predicated region
      $region9: #{tpu_custom_call.1} parent=5 // pred_check
        %p47 = pneg %p46
      $region10: #{tpu_custom_call.1} parent=5 // pred_check_branch
        %49 = sbr.rel (%p47) target = $region12
      $region11: #{tpu_custom_call.1} parent=5 // pred_region
        %p50 = pneg %p38
        %p51 = pneg %p35
        %s52 = sand.u32 %s29, 1
        %s53 = scalar_lea.sflag [#allocation7], %s52
        %s54 = sand.u32 %s29, 1
        %s55 = smul.addr %s54, 8
        %s56 = scalar_lea.vmem [#allocation6], %s55
        %s57 = smul.u32 %s20, 8
        %p58 = scmp.lt.s32.totalorder %s57, 31
        %s59 = scalar_select %p58, %s57, 31
        %s60 = sld [smem:[#allocation4 + %s59]]
        %p61 = scmp.lt.s32.totalorder %s59, 0
        %s62 = ssub.s32 0, %s59
        %s63 = scalar_select %p61, %s62, %s59
        %s64 = sand.u32 %s63, 3
        %s65 = ssub.s32 0, %s64
        %s66 = scalar_select %p61, %s65, %s64
        %p67 = scmp.ne.s32.totalorder %s66, 0
        %p68 = scmp.lt.s32.totalorder %s66, 0
        %p69 = pnand %p68, %p67
        %p70 = pneg %p69
        %s71 = sadd.s32 %s66, 4
        %s72 = scalar_select %p70, %s71, %s66
        %s73 = sld [smem:[#allocation5 + %s72]]
        %s74 = sadd.s32 %s60, %s73
        %s75 = smul.addr %s74, 16
        %s76 = scalar_lea.hbm %s2, %s75
        // Predicated region
        $region13: #{tpu_custom_call.1} parent=11 // pred_check
          _
        $region14: #{tpu_custom_call.1} parent=11 // pred_check_branch
          %78 = sbr.rel target = $region16
        $region15: #{tpu_custom_call.1} parent=11 // pred_region
          %79 = sst [smem:[#allocation10]] [#allocation9]
          %80 = sst [smem:[#allocation11]] [#allocation8]
        $region16: #{tpu_custom_call.1} parent=11 // pred_fallthru
          _
        %82 = shalt.err (0)
        %s84 = sshll.u32 %s56, 4
        %s85 = int_to_ptr.vmem [resolvable:$true] %s84
        %87 = dma.hbm_to_vmem [thread:$0]  %s76, 16, %s85, [#allocation2]
        %s88 = sadd.s32 %s57, 1
        %p89 = scmp.lt.s32.totalorder %s88, 31
        %s90 = scalar_select %p89, %s88, 31
        %s91 = sld [smem:[#allocation4 + %s90]]
        %p92 = scmp.lt.s32.totalorder %s90, 0
        %s93 = ssub.s32 0, %s90
        %s94 = scalar_select %p92, %s93, %s90
        %s95 = sand.u32 %s94, 3
        %s96 = ssub.s32 0, %s95
        %s97 = scalar_select %p92, %s96, %s95
        %p98 = scmp.ne.s32.totalorder %s97, 0
        %p99 = scmp.lt.s32.totalorder %s97, 0
        %p100 = pnand %p99, %p98
        %p101 = pneg %p100
        %s102 = sadd.s32 %s97, 4
        %s103 = scalar_select %p101, %s102, %s97
        %s104 = sld [smem:[#allocation5 + %s103]]
        %s105 = sadd.s32 %s91, %s104
        %s106 = smul.addr %s105, 16
        %s107 = scalar_lea.hbm %s2, %s106
        %s108 = scalar_lea.vmem %s56, 1 [#allocation6]
        %s109 = scalar_lea.sflag [#allocation2], 1
        // Predicated region
        $region17: #{tpu_custom_call.1} parent=11 // pred_check
          _
        $region18: #{tpu_custom_call.1} parent=11 // pred_check_branch
          %111 = sbr.rel target = $region20
        $region19: #{tpu_custom_call.1} parent=11 // pred_region
          %112 = sst [smem:[#allocation10]] [#allocation13]
          %113 = sst [smem:[#allocation11]] [#allocation12]
        $region20: #{tpu_custom_call.1} parent=11 // pred_fallthru
          _
        %115 = shalt.err (0)
        %s117 = sshll.u32 %s108, 4
        %s118 = int_to_ptr.vmem [resolvable:$true] %s117
        %120 = dma.hbm_to_vmem [thread:$0]  %s107, 16, %s118, %s109
        %s121 = sadd.s32 %s57, 2
        %p122 = scmp.lt.s32.totalorder %s121, 31
        %s123 = scalar_select %p122, %s121, 31
        %s124 = sld [smem:[#allocation4 + %s123]]
        %p125 = scmp.lt.s32.totalorder %s123, 0
        %s126 = ssub.s32 0, %s123
        %s127 = scalar_select %p125, %s126, %s123
        %s128 = sand.u32 %s127, 3
        %s129 = ssub.s32 0, %s128
        %s130 = scalar_select %p125, %s129, %s128
        %p131 = scmp.ne.s32.totalorder %s130, 0
        %p132 = scmp.lt.s32.totalorder %s130, 0
        %p133 = pnand %p132, %p131
        %p134 = pneg %p133
        %s135 = sadd.s32 %s130, 4
        %s136 = scalar_select %p134, %s135, %s130
        %s137 = sld [smem:[#allocation5 + %s136]]
        %s138 = sadd.s32 %s124, %s137
        %s139 = smul.addr %s138, 16
        %s140 = scalar_lea.hbm %s2, %s139
        %s141 = scalar_lea.vmem %s56, 2 [#allocation6]
        %s142 = scalar_lea.sflag [#allocation2], 2
        // Predicated region
        $region21: #{tpu_custom_call.1} parent=11 // pred_check
          _
        $region22: #{tpu_custom_call.1} parent=11 // pred_check_branch
          %144 = sbr.rel target = $region24
        $region23: #{tpu_custom_call.1} parent=11 // pred_region
          %145 = sst [smem:[#allocation10]] [#allocation15]
          %146 = sst [smem:[#allocation11]] [#allocation14]
        $region24: #{tpu_custom_call.1} parent=11 // pred_fallthru
          _
        %148 = shalt.err (0)
        %s150 = sshll.u32 %s141, 4
        %s151 = int_to_ptr.vmem [resolvable:$true] %s150
        %153 = dma.hbm_to_vmem [thread:$0]  %s140, 16, %s151, %s142
        %s154 = sadd.s32 %s57, 3
        %p155 = scmp.lt.s32.totalorder %s154, 31
        %s156 = scalar_select %p155, %s154, 31
        %s157 = sld [smem:[#allocation4 + %s156]]
        %p158 = scmp.lt.s32.totalorder %s156, 0
        %s159 = ssub.s32 0, %s156
        %s160 = scalar_select %p158, %s159, %s156
        %s161 = sand.u32 %s160, 3
        %s162 = ssub.s32 0, %s161
        %s163 = scalar_select %p158, %s162, %s161
        %p164 = scmp.ne.s32.totalorder %s163, 0
        %p165 = scmp.lt.s32.totalorder %s163, 0
        %p166 = pnand %p165, %p164
        %p167 = pneg %p166
        %s168 = sadd.s32 %s163, 4
        %s169 = scalar_select %p167, %s168, %s163
        %s170 = sld [smem:[#allocation5 + %s169]]
        %s171 = sadd.s32 %s157, %s170
        %s172 = smul.addr %s171, 16
        %s173 = scalar_lea.hbm %s2, %s172
        %s174 = scalar_lea.vmem %s56, 3 [#allocation6]
        %s175 = scalar_lea.sflag [#allocation2], 3
        // Predicated region
        $region25: #{tpu_custom_call.1} parent=11 // pred_check
          _
        $region26: #{tpu_custom_call.1} parent=11 // pred_check_branch
          %177 = sbr.rel target = $region28
        $region27: #{tpu_custom_call.1} parent=11 // pred_region
          %178 = sst [smem:[#allocation10]] [#allocation17]
          %179 = sst [smem:[#allocation11]] [#allocation16]
        $region28: #{tpu_custom_call.1} parent=11 // pred_fallthru
          _
        %181 = shalt.err (0)
        %s183 = sshll.u32 %s174, 4
        %s184 = int_to_ptr.vmem [resolvable:$true] %s183
        %186 = dma.hbm_to_vmem [thread:$0]  %s173, 16, %s184, %s175
        %s187 = sadd.s32 %s57, 4
        %p188 = scmp.lt.s32.totalorder %s187, 31
        %s189 = scalar_select %p188, %s187, 31
        %s190 = sld [smem:[#allocation4 + %s189]]
        %p191 = scmp.lt.s32.totalorder %s189, 0
        %s192 = ssub.s32 0, %s189
        %s193 = scalar_select %p191, %s192, %s189
        %s194 = sand.u32 %s193, 3
        %s195 = ssub.s32 0, %s194
        %s196 = scalar_select %p191, %s195, %s194
        %p197 = scmp.ne.s32.totalorder %s196, 0
        %p198 = scmp.lt.s32.totalorder %s196, 0
        %p199 = pnand %p198, %p197
        %p200 = pneg %p199
        %s201 = sadd.s32 %s196, 4
        %s202 = scalar_select %p200, %s201, %s196
        %s203 = sld [smem:[#allocation5 + %s202]]
        %s204 = sadd.s32 %s190, %s203
        %s205 = smul.addr %s204, 16
        %s206 = scalar_lea.hbm %s2, %s205
        %s207 = scalar_lea.vmem %s56, 4 [#allocation6]
        %s208 = scalar_lea.sflag [#allocation2], 4
        // Predicated region
        $region29: #{tpu_custom_call.1} parent=11 // pred_check
          _
        $region30: #{tpu_custom_call.1} parent=11 // pred_check_branch
          %210 = sbr.rel target = $region32
        $region31: #{tpu_custom_call.1} parent=11 // pred_region
          %211 = sst [smem:[#allocation10]] [#allocation19]
          %212 = sst [smem:[#allocation11]] [#allocation18]
        $region32: #{tpu_custom_call.1} parent=11 // pred_fallthru
          _
        %214 = shalt.err (0)
        %s216 = sshll.u32 %s207, 4
        %s217 = int_to_ptr.vmem [resolvable:$true] %s216
        %219 = dma.hbm_to_vmem [thread:$0]  %s206, 16, %s217, %s208
        %s220 = sadd.s32 %s57, 5
        %p221 = scmp.lt.s32.totalorder %s220, 31
        %s222 = scalar_select %p221, %s220, 31
        %s223 = sld [smem:[#allocation4 + %s222]]
        %p224 = scmp.lt.s32.totalorder %s222, 0
        %s225 = ssub.s32 0, %s222
        %s226 = scalar_select %p224, %s225, %s222
        %s227 = sand.u32 %s226, 3
        %s228 = ssub.s32 0, %s227
        %s229 = scalar_select %p224, %s228, %s227
        %p230 = scmp.ne.s32.totalorder %s229, 0
        %p231 = scmp.lt.s32.totalorder %s229, 0
        %p232 = pnand %p231, %p230
        %p233 = pneg %p232
        %s234 = sadd.s32 %s229, 4
        %s235 = scalar_select %p233, %s234, %s229
        %s236 = sld [smem:[#allocation5 + %s235]]
        %s237 = sadd.s32 %s223, %s236
        %s238 = smul.addr %s237, 16
        %s239 = scalar_lea.hbm %s2, %s238
        %s240 = scalar_lea.vmem %s56, 5 [#allocation6]
        %s241 = scalar_lea.sflag [#allocation2], 5
        // Predicated region
        $region33: #{tpu_custom_call.1} parent=11 // pred_check
          _
        $region34: #{tpu_custom_call.1} parent=11 // pred_check_branch
          %243 = sbr.rel target = $region36
        $region35: #{tpu_custom_call.1} parent=11 // pred_region
          %244 = sst [smem:[#allocation10]] [#allocation21]
          %245 = sst [smem:[#allocation11]] [#allocation20]
        $region36: #{tpu_custom_call.1} parent=11 // pred_fallthru
          _
        %247 = shalt.err (0)
        %s249 = sshll.u32 %s240, 4
        %s250 = int_to_ptr.vmem [resolvable:$true] %s249
        %252 = dma.hbm_to_vmem [thread:$0]  %s239, 16, %s250, %s241
        %s253 = sadd.s32 %s57, 6
        %p254 = scmp.lt.s32.totalorder %s253, 31
        %s255 = scalar_select %p254, %s253, 31
        %s256 = sld [smem:[#allocation4 + %s255]]
        %p257 = scmp.lt.s32.totalorder %s255, 0
        %s258 = ssub.s32 0, %s255
        %s259 = scalar_select %p257, %s258, %s255
        %s260 = sand.u32 %s259, 3
        %s261 = ssub.s32 0, %s260
        %s262 = scalar_select %p257, %s261, %s260
        %p263 = scmp.ne.s32.totalorder %s262, 0
        %p264 = scmp.lt.s32.totalorder %s262, 0
        %p265 = pnand %p264, %p263
        %p266 = pneg %p265
        %s267 = sadd.s32 %s262, 4
        %s268 = scalar_select %p266, %s267, %s262
        %s269 = sld [smem:[#allocation5 + %s268]]
        %s270 = sadd.s32 %s256, %s269
        %s271 = smul.addr %s270, 16
        %s272 = scalar_lea.hbm %s2, %s271
        %s273 = scalar_lea.vmem %s56, 6 [#allocation6]
        %s274 = scalar_lea.sflag [#allocation2], 6
        // Predicated region
        $region37: #{tpu_custom_call.1} parent=11 // pred_check
          _
        $region38: #{tpu_custom_call.1} parent=11 // pred_check_branch
          %276 = sbr.rel target = $region40
        $region39: #{tpu_custom_call.1} parent=11 // pred_region
          %277 = sst [smem:[#allocation10]] [#allocation23]
          %278 = sst [smem:[#allocation11]] [#allocation22]
        $region40: #{tpu_custom_call.1} parent=11 // pred_fallthru
          _
        %280 = shalt.err (0)
        %s282 = sshll.u32 %s273, 4
        %s283 = int_to_ptr.vmem [resolvable:$true] %s282
        %285 = dma.hbm_to_vmem [thread:$0]  %s272, 16, %s283, %s274
        %s286 = sadd.s32 %s57, 7
        %p287 = scmp.lt.s32.totalorder %s286, 31
        %s288 = scalar_select %p287, %s286, 31
        %s289 = sld [smem:[#allocation4 + %s288]]
        %p290 = scmp.lt.s32.totalorder %s288, 0
        %s291 = ssub.s32 0, %s288
        %s292 = scalar_select %p290, %s291, %s288
        %s293 = sand.u32 %s292, 3
        %s294 = ssub.s32 0, %s293
        %s295 = scalar_select %p290, %s294, %s293
        %p296 = scmp.ne.s32.totalorder %s295, 0
        %p297 = scmp.lt.s32.totalorder %s295, 0
        %p298 = pnand %p297, %p296
        %p299 = pneg %p298
        %s300 = sadd.s32 %s295, 4
        %s301 = scalar_select %p299, %s300, %s295
        %s302 = sld [smem:[#allocation5 + %s301]]
        %s303 = sadd.s32 %s289, %s302
        %s304 = smul.addr %s303, 16
        %s305 = scalar_lea.hbm %s2, %s304
        %s306 = scalar_lea.vmem %s56, 7 [#allocation6]
        %s307 = scalar_lea.sflag [#allocation2], 7
        // Predicated region
        $region41: #{tpu_custom_call.1} parent=11 // pred_check
          _
        $region42: #{tpu_custom_call.1} parent=11 // pred_check_branch
          %309 = sbr.rel target = $region44
        $region43: #{tpu_custom_call.1} parent=11 // pred_region
          %310 = sst [smem:[#allocation10]] [#allocation25]
          %311 = sst [smem:[#allocation11]] [#allocation24]
        $region44: #{tpu_custom_call.1} parent=11 // pred_fallthru
          _
        %313 = shalt.err (0)
        %s315 = sshll.u32 %s306, 4
        %s316 = int_to_ptr.vmem [resolvable:$true] %s315
        %318 = dma.hbm_to_vmem [thread:$0]  %s305, 16, %s316, %s307
        %s319 = smul.u32 1, 1
        %s320 = sshll.u32 %s319, 4
        %321 = dma.done [#allocation2], %s320
        %s322 = sshll.u32 %s319, 4
        %323 = dma.done %s109, %s322
        %s324 = sshll.u32 %s319, 4
        %325 = dma.done %s142, %s324
        %s326 = sshll.u32 %s319, 4
        %327 = dma.done %s175, %s326
        %s328 = sshll.u32 %s319, 4
        %329 = dma.done %s208, %s328
        %s330 = sshll.u32 %s319, 4
        %331 = dma.done %s241, %s330
        %s332 = sshll.u32 %s319, 4
        %333 = dma.done %s274, %s332
        %s334 = sshll.u32 %s319, 4
        %335 = dma.done %s307, %s334
        %s336 = sand.u32 %s29, 1
        %s337 = scalar_lea.sflag [#allocation7], %s336
        %s338 = sand.u32 %s29, 1
        %s339 = smul.addr %s338, 8
        %s340 = scalar_lea.vmem [#allocation6], %s339
        // Predicated region
        $region45: #{tpu_custom_call.1} parent=11 // pred_check
          %p341 = pneg %p35
        $region46: #{tpu_custom_call.1} parent=11 // pred_check_branch
          %343 = sbr.rel (%p341) target = $region48
        $region47: #{tpu_custom_call.1} parent=11 // pred_region
          %s345 = ssub.s32 128, 128
          %346 = vsyncadd %s337, %s345
          %s347 = smul.addr %s20, 128
          %s348 = scalar_lea.hbm %s3, %s347
          %s350 = sshll.u32 %s340, 4
          %s351 = int_to_ptr.vmem [resolvable:$true] %s350
          %353 = dma.vmem_to_hbm [thread:$0]  %s351, 128, %s348, %s337
        $region48: #{tpu_custom_call.1} parent=11 // pred_fallthru
          _
      $region12: #{tpu_custom_call.1} parent=5 // pred_fallthru
        _
      %p354 = scmp.le.s32.totalorder 1, %s20
      // Predicated region
      $region49: #{tpu_custom_call.1} parent=5 // pred_check
        %p355 = pneg %p354
      $region50: #{tpu_custom_call.1} parent=5 // pred_check_branch
        %357 = sbr.rel (%p355) target = $region52
      $region51: #{tpu_custom_call.1} parent=5 // pred_region
        %s358 = ssub.s32 %s20, 1
        // Predicated region
        $region53: #{tpu_custom_call.1} parent=51 // pred_check
          %p359 = pneg %p41
        $region54: #{tpu_custom_call.1} parent=51 // pred_check_branch
          %361 = sbr.rel (%p359) target = $region56
        $region55: #{tpu_custom_call.1} parent=51 // pred_region
          %s362 = sand.u32 %s32, 1
          %s363 = scalar_lea.sflag [#allocation7], %s362
          %s364 = sand.u32 %s32, 1
          %s365 = smul.addr %s364, 8
          %s366 = scalar_lea.vmem [#allocation6], %s365
          %367 = dma.done %s363, 128
        $region56: #{tpu_custom_call.1} parent=51 // pred_fallthru
          _
      $region52: #{tpu_custom_call.1} parent=5 // pred_fallthru
        _
    $region6: #{tpu_custom_call.1} parent=1 // loop_footer
      %s24 = sadd.s32 1, %s20
    $region7: #{tpu_custom_call.1} parent=1 // loop_footer_branch
      %19 = sbr.rel target = $region3
    $region8: #{tpu_custom_call.1} parent=1 // loop_exit
      _
    %368 = vsyncpa [#allocation7], 1
    %s369 = scalar_lea.sflag [#allocation7], 1
    %370 = vsyncpa %s369, 1
  %371 = vsyncmov [#allocation2]
  %s372 = vpop.sfrf %371
  %p373 = scmp.eq.s32.totalorder %s372, 0
  %p374 = pneg %p373
  %376 = shalt.err (%p374)
  %s377 = scalar_lea.sflag [#allocation2], 1
  %378 = vsyncmov %s377
  %s379 = vpop.sfrf %378
  %p380 = scmp.eq.s32.totalorder %s379, 0
  %p381 = pneg %p380
  %383 = shalt.err (%p381)
  %s384 = scalar_lea.sflag [#allocation2], 2
  %385 = vsyncmov %s384
  %s386 = vpop.sfrf %385
  %p387 = scmp.eq.s32.totalorder %s386, 0
  %p388 = pneg %p387
  %390 = shalt.err (%p388)
  %s391 = scalar_lea.sflag [#allocation2], 3
  %392 = vsyncmov %s391
  %s393 = vpop.sfrf %392
  %p394 = scmp.eq.s32.totalorder %s393, 0
  %p395 = pneg %p394
  %397 = shalt.err (%p395)
  %s398 = scalar_lea.sflag [#allocation2], 4
  %399 = vsyncmov %s398
  %s400 = vpop.sfrf %399
  %p401 = scmp.eq.s32.totalorder %s400, 0
  %p402 = pneg %p401
  %404 = shalt.err (%p402)
  %s405 = scalar_lea.sflag [#allocation2], 5
  %406 = vsyncmov %s405
  %s407 = vpop.sfrf %406
  %p408 = scmp.eq.s32.totalorder %s407, 0
  %p409 = pneg %p408
  %411 = shalt.err (%p409)
  %s412 = scalar_lea.sflag [#allocation2], 6
  %413 = vsyncmov %s412
  %s414 = vpop.sfrf %413
  %p415 = scmp.eq.s32.totalorder %s414, 0
  %p416 = pneg %p415
  %418 = shalt.err (%p416)
  %s419 = scalar_lea.sflag [#allocation2], 7
  %420 = vsyncmov %s419
  %s421 = vpop.sfrf %420
  %p422 = scmp.eq.s32.totalorder %s421, 0
  %p423 = pneg %p422
  %425 = shalt.err (%p423)

</llo_original>
